<compile_context>
chip_gen: v7x
topology: tpu7x:2x2x1
jax: 0.10.0
libtpu: 0.0.40
codegen_flags: <defaults>
</compile_context>

<pallas_src>
import jax
import jax.numpy as jnp
from jax.experimental import pallas as pl
from jax.experimental.pallas import tpu as pltpu


def _orthogonal_fusion_kernel(local_ref, g_row_ref, g_col_ref, out_ref):
    # local_ref : (1, C, THW)     spatial tile of one batch element (native dtype)
    # g_row_ref : (1, 1, C)       global descriptor pre-scaled by 1/||g||^2 (MXU dot)
    # g_col_ref : (1, C, 1)       unscaled global descriptor (broadcast + outer product)
    # out_ref   : (1, 2, C, THW)  [0] = broadcast global, [1] = orthogonal component
    local = local_ref[0]                       # (C, THW) — no full-tile upcast
    g_row = g_row_ref[0]                       # (1, C)   already scaled by 1/||g||^2
    g_col = g_col_ref[0]                       # (C, 1)   unscaled

    # projection coefficient per spatial position: (g/||g||^2) . local  — MXU, f32 acc
    p = jnp.dot(g_row, local, preferred_element_type=jnp.float32)      # (1, THW)
    p = p.astype(local.dtype)                  # only the small row is cast back

    # orthogonal component, written directly (no materialized full-proj temporary
    # beyond the single (C, THW) outer product feeding the subtract)
    out_ref[0, 1, :, :] = (local - g_col * p).astype(out_ref.dtype)
    # global feature broadcast over the spatial tile
    out_ref[0, 0, :, :] = jnp.broadcast_to(g_col, local.shape).astype(out_ref.dtype)


def _vmem_config():
    """Return (tile_budget_bytes, vmem_limit_bytes), generation aware."""
    phys = 128 * 1024 * 1024
    try:
        info = pltpu.get_tpu_info()
        phys = getattr(info, "vmem_capacity_bytes", phys) or phys
    except Exception:
        pass
    if phys <= 64 * 1024 * 1024:
        # v7x: 64 MiB per TensorCore -> keep the scoped target well under it
        limit = 44 * 1024 * 1024
    else:
        # v5e / v6e: 128 MiB physical -> ~56 MiB scoped
        limit = 56 * 1024 * 1024
    # ~2 MiB headroom under the scoped limit for the g buffers / compiler scratch
    return limit - 2 * 1024 * 1024, limit


def _choose_thw(C, HW, itemsize, tile_budget):
    """Largest lane-dense spatial tile fitting the (double-buffered) VMEM budget."""
    # per step: local (C*thw) + out (2*C*thw), double-buffered => 6*C*thw*itemsize
    per_col = 6 * C * itemsize
    cap = max(128, tile_budget // per_col)
    if HW <= cap:
        return HW                                # full-extent escape hatch (any HW)
    top = max(128, (min(cap, HW) // 128) * 128)  # largest multiple of 128 that fits
    # prefer an exact divisor of HW (no ragged tail / masked edge stores)
    t, iters = top, 0
    while t >= 128 and iters < 8192:
        if HW % t == 0:
            return t
        t -= 128
        iters += 1
    return top                                   # ragged-tail fallback (edge is masked)


def orthogonal_fusion(local_feat, global_feat):
    """local_feat: (B, C, H, W), global_feat: (B, C) -> (B, 2C, H, W)."""
    B, C, H, W = local_feat.shape
    HW = H * W
    dtype = local_feat.dtype
    itemsize = jnp.dtype(dtype).itemsize

    tile_budget, vmem_limit = _vmem_config()
    thw = _choose_thw(C, HW, itemsize, tile_budget)
    n_spatial = pl.cdiv(HW, thw)

    local_flat = local_feat.reshape(B, C, HW)

    # Hoist ||g||^2 out of the kernel (O(B*C) wrapper work vs O(B*C*HW) traffic).
    # Fold 1/||g||^2 into the row used by the dot; keep the column unscaled for the
    # broadcast half.  (Like the PyTorch reference, ||g||==0 yields Inf/NaN.)
    gf32 = global_feat.astype(jnp.float32)
    inv_norm_sq = 1.0 / jnp.sum(gf32 * gf32, axis=1, keepdims=True)       # (B, 1)
    g_row = (gf32 * inv_norm_sq).astype(dtype).reshape(B, 1, C)           # scaled
    g_col = global_feat.astype(dtype).reshape(B, C, 1)                    # unscaled

    out = pl.pallas_call(
        _orthogonal_fusion_kernel,
        out_shape=jax.ShapeDtypeStruct((B, 2, C, HW), dtype),
        grid=(B, n_spatial),
        in_specs=[
            pl.BlockSpec((1, C, thw), lambda b, s: (b, 0, s)),
            pl.BlockSpec((1, 1, C), lambda b, s: (b, 0, 0)),
            pl.BlockSpec((1, C, 1), lambda b, s: (b, 0, 0)),
        ],
        out_specs=pl.BlockSpec((1, 2, C, thw), lambda b, s: (b, 0, 0, s)),
        compiler_params=pltpu.CompilerParams(
            dimension_semantics=("parallel", "parallel"),
            vmem_limit_bytes=vmem_limit),
    )(local_flat, g_row, g_col)

    # (B, 2, C, HW) -> (B, 2C, H, W): contiguous, so this reshape is free.
    return out.reshape(B, 2 * C, H, W)


def _reference(local_feat, global_feat):
    B, C, H, W = local_feat.shape
    lf = local_feat.reshape(B, C, H * W)
    norm_sq = jnp.sum(global_feat * global_feat, axis=1)                  # (B,)
    p = jnp.einsum("bc,bcs->bs", global_feat, lf)                         # (B, HW)
    proj = jnp.einsum("bc,bs->bcs", global_feat, p) / norm_sq[:, None, None]
    orth = (lf - proj).reshape(B, C, H, W)
    g_exp = jnp.broadcast_to(global_feat[:, :, None, None], (B, C, H, W))
    return jnp.concatenate([g_exp, orth], axis=1)


if __name__ == "__main__":
    key = jax.random.PRNGKey(0)
    k1, k2 = jax.random.split(key)
    B, C, H, W = 2, 4, 16, 16
    local_feat = jax.random.normal(k1, (B, C, H, W), dtype=jnp.float32)
    global_feat = jax.random.normal(k2, (B, C), dtype=jnp.float32)

    out = orthogonal_fusion(local_feat, global_feat)
    out = jax.block_until_ready(out)

    ref = _reference(local_feat, global_feat)
    assert out.shape == (B, 2 * C, H, W)
    assert jnp.allclose(out, ref, atol=1e-5, rtol=1e-5)
    print("KERNEL_OK")
</pallas_src>

<mosaic_0001>
module attributes {stable_mosaic.version = 11 : i64} {
  func.func @_orthogonal_fusion_kernel(%arg0: i32, %arg1: i32, %arg2: memref<1x4x256xf32, #tpu.memory_space<vmem>>, %arg3: memref<1x1x4xf32, #tpu.memory_space<vmem>>, %arg4: memref<1x4x1xf32, #tpu.memory_space<vmem>>, %arg5: memref<1x2x4x256xf32, #tpu.memory_space<vmem>>) attributes {dimension_semantics = [#tpu.dimension_semantics<parallel>, #tpu.dimension_semantics<parallel>], iteration_bounds = array<i64: 2, 1>, scalar_prefetch = 0 : i64, scratch_operands = 0 : i64, tpu.core_type = #tpu.core_type<tc>, window_params = [{transform_indices = @transform_0, window_bounds = array<i64: 1, 4, 256>}, {transform_indices = @transform_1, window_bounds = array<i64: 1, 1, 4>}, {transform_indices = @transform_2, window_bounds = array<i64: 1, 4, 1>}, {transform_indices = @transform_3, window_bounds = array<i64: 1, 2, 4, 256>}]} {
    %c0 = arith.constant 0 : index
    %c0_0 = arith.constant 0 : index
    %c0_1 = arith.constant 0 : index
    %0 = vector.load %arg2[%c0, %c0_0, %c0_1] : memref<1x4x256xf32, #tpu.memory_space<vmem>>, vector<1x4x256xf32>
    %1 = vector.shape_cast %0 : vector<1x4x256xf32> to vector<4x256xf32>
    %c0_2 = arith.constant 0 : index
    %c0_3 = arith.constant 0 : index
    %c0_4 = arith.constant 0 : index
    %2 = vector.load %arg3[%c0_2, %c0_3, %c0_4] : memref<1x1x4xf32, #tpu.memory_space<vmem>>, vector<1x1x4xf32>
    %3 = vector.shape_cast %2 : vector<1x1x4xf32> to vector<1x4xf32>
    %c0_5 = arith.constant 0 : index
    %c0_6 = arith.constant 0 : index
    %c0_7 = arith.constant 0 : index
    %4 = vector.load %arg4[%c0_5, %c0_6, %c0_7] : memref<1x4x1xf32, #tpu.memory_space<vmem>>, vector<1x4x1xf32>
    %5 = vector.shape_cast %4 : vector<1x4x1xf32> to vector<4x1xf32>
    %cst = arith.constant dense<0.000000e+00> : vector<1x256xf32>
    %6 = tpu.matmul %3, %1, %cst {dimension_numbers = #tpu.dot_dimension_numbers<[1], [0], [0], [1], [0, 0, 1, 1], [], []>} : vector<1x4xf32>, vector<4x256xf32>, vector<1x256xf32> -> vector<1x256xf32>
    %7 = vector.broadcast %5 : vector<4x1xf32> to vector<4x256xf32>
    %8 = vector.broadcast %6 : vector<1x256xf32> to vector<4x256xf32>
    %9 = arith.mulf %7, %8 : vector<4x256xf32>
    %10 = arith.subf %1, %9 : vector<4x256xf32>
    %c0_8 = arith.constant 0 : index
    %c1 = arith.constant 1 : index
    %c0_9 = arith.constant 0 : index
    %c0_10 = arith.constant 0 : index
    %11 = vector.load %arg5[%c0_8, %c1, %c0_9, %c0_10] : memref<1x2x4x256xf32, #tpu.memory_space<vmem>>, vector<1x1x4x256xf32>
    %12 = vector.shape_cast %11 : vector<1x1x4x256xf32> to vector<4x256xf32>
    %13 = vector.shape_cast %10 : vector<4x256xf32> to vector<1x1x4x256xf32>
    tpu.vector_store %arg5[%c0_8, %c1, %c0_9, %c0_10], %13 {strides = array<i32>} : memref<1x2x4x256xf32, #tpu.memory_space<vmem>>, vector<1x1x4x256xf32>,
    %14 = vector.shape_cast %5 : vector<4x1xf32> to vector<4x1xf32>
    %15 = vector.broadcast %14 : vector<4x1xf32> to vector<4x256xf32>
    %c0_11 = arith.constant 0 : index
    %c0_12 = arith.constant 0 : index
    %c0_13 = arith.constant 0 : index
    %c0_14 = arith.constant 0 : index
    %16 = vector.load %arg5[%c0_11, %c0_12, %c0_13, %c0_14] : memref<1x2x4x256xf32, #tpu.memory_space<vmem>>, vector<1x1x4x256xf32>
    %17 = vector.shape_cast %16 : vector<1x1x4x256xf32> to vector<4x256xf32>
    %18 = vector.shape_cast %15 : vector<4x256xf32> to vector<1x1x4x256xf32>
    tpu.vector_store %arg5[%c0_11, %c0_12, %c0_13, %c0_14], %18 {strides = array<i32>} : memref<1x2x4x256xf32, #tpu.memory_space<vmem>>, vector<1x1x4x256xf32>,
    return
  }
  func.func @transform_0(%arg0: i32, %arg1: i32) -> (i32, i32, i32) {
    %c0_i32 = arith.constant 0 : i32
    %c0_i32_0 = arith.constant 0 : i32
    return %arg0, %c0_i32, %arg1 : i32, i32, i32
  }
  func.func @transform_1(%arg0: i32, %arg1: i32) -> (i32, i32, i32) {
    %c0_i32 = arith.constant 0 : i32
    %c0_i32_0 = arith.constant 0 : i32
    %c0_i32_1 = arith.constant 0 : i32
    return %arg0, %c0_i32, %c0_i32_0 : i32, i32, i32
  }
  func.func @transform_2(%arg0: i32, %arg1: i32) -> (i32, i32, i32) {
    %c0_i32 = arith.constant 0 : i32
    %c0_i32_0 = arith.constant 0 : i32
    %c0_i32_1 = arith.constant 0 : i32
    return %arg0, %c0_i32, %c0_i32_0 : i32, i32, i32
  }
  func.func @transform_3(%arg0: i32, %arg1: i32) -> (i32, i32, i32, i32) {
    %c0_i32 = arith.constant 0 : i32
    %c0_i32_0 = arith.constant 0 : i32
    %c0_i32_1 = arith.constant 0 : i32
    return %arg0, %c0_i32, %c0_i32_0, %arg1 : i32, i32, i32, i32
  }
}

</mosaic_0001>

<llo_original>
// kernel: tpu_custom_call.1
$region0: #{tpu_custom_call.1}
  #allocation0 [shape = 'u32[]', space=smem, size = 0x4, offset = 0x4, fixed_abs, tag = 'smem constant byte address 0x4 - core index']
  #allocation1 [shape = 'u32[144,128]{1,0:T(1,128)}', space=vmem, size = 0x12000, scoped, tag = 'internal scratch']
  %s0 = inlined_call_operand.hbm [shape: f32[2,4,256], index: 0, kind: input, shape index: {}]
  %s1 = inlined_call_operand.vmem [shape: f32[2,1,4], index: 1, kind: input, shape index: {}]
  %s2 = inlined_call_operand.vmem [shape: f32[2,4,1], index: 2, kind: input, shape index: {}]
  %s3 = inlined_call_operand.hbm [shape: f32[2,2,4,256], index: 3, kind: output, shape index: {}]
  %s4 = sld [smem:[#allocation0]]
  $region49: #{tpu_custom_call.1} parent=0
    _
  %s6 = ssub.s32 1, %s4
  %s7 = scalar_select 0, %s6, %s4
  $region1: #{tpu_custom_call.1} parent=0
    #allocation2 [shape = 'u8[8192]{0}', space=vmem, size = 0x2000, scoped, tag = 'input window, operand 0']
    #allocation3 [shape = 's32[2]{0}', space=sflag, size = 0x8, scoped, tag = 'scoped memory for tpu_custom_call.1']
    #allocation4 [shape = 's32[2]{0}', space=sflag, size = 0x8, scoped, tag = 'scoped memory for tpu_custom_call.1']
    #allocation5 [shape = 'u8[16384]{0}', space=vmem, size = 0x4000, scoped, tag = 'output window, operand 0']
    %8 = vsyncpa [#allocation3], 0
    %s9 = scalar_lea.sflag [#allocation3], 1
    %10 = vsyncpa %s9, 0
    %11 = vsyncpa [#allocation4], 0
    %s12 = scalar_lea.sflag [#allocation4], 1
    %13 = vsyncpa %s12, 0
    loop: start=0, step=1, limit=4
    $region2: #{tpu_custom_call.1} parent=1 // loop_pre_header
      _
    $region3: #{tpu_custom_call.1} parent=1 // loop_header
      %s15 = sphi 0, %s19
      %p16 = scmp.ge.s32.totalorder %s15, 4
      %s22 = sphi 0, %s34
      %s23 = sphi 0, %s30
      %s24 = sphi 0, %s22
      %s25 = sphi 0, %s23
      %s26 = sphi 0, %s24
      %s27 = sphi 0, %s25
      %s39 = sphi 0, %s41
      %s42 = sphi 0, %s39
      %s43 = sphi 0, %s42
      %s59 = sphi 0, %s43
      %s65 = sphi 0, %s67
      %s68 = sphi 0, %s65
      %s69 = sphi 0, %s68
      %s85 = sphi 0, %s69
      %s91 = sphi 0, %s93
      %s94 = sphi 0, %s91
      %s95 = sphi 0, %s94
      %s111 = sphi 0, %s95
      %s119 = sphi 0, %s121
      %s122 = sphi 0, %s119
      %s123 = sphi 0, %s122
      %s139 = sphi 0, %s123
    $region4: #{tpu_custom_call.1} parent=1 // loop_header_branch
      %18 = sbr.rel (%p16) target = $region8
    $region5: #{tpu_custom_call.1} parent=1 // loop_body
      %s20 = ssub.s32 %s15, 1
      %s21 = ssub.s32 %s15, 2
      %s28 = sadd.s32 1, %s23
      %p29 = scmp.ge.s32.totalorder %s28, 1
      %s30 = scalar_select %p29, 0, %s28
      %s31 = sadd.s32 1, %s22
      %s32 = scalar_select %p29, %s31, %s22
      %p33 = scmp.ge.s32.totalorder %s32, 2
      %s34 = scalar_select %p33, 0, %s32
      %s35 = ssub.s32 %s22, %s34
      %s36 = ssub.s32 %s23, %s30
      %s37 = sor.u32 %s35, %s36
      %p38 = scmp.eq.s32.totalorder %s37, 0
      %s40 = sadd.s32 %s39, 1
      %s41 = scalar_select %p38, %s39, %s40
      %p44 = pneg %p38
      %p45 = scmp.eq.s32.totalorder %s15, 1
      %p46 = por %p44, %p45
      %p47 = scmp.ne.s32.totalorder %s39, %s42
      %p48 = scmp.eq.s32.totalorder %s15, 0
      %p49 = por %p47, %p48
      %p50 = scmp.ne.s32.totalorder %s39, %s42
      %p51 = scmp.eq.s32.totalorder %s20, 1
      %p52 = por %p50, %p51
      %p53 = scmp.ne.s32.totalorder %s42, %s43
      %p54 = scmp.eq.s32.totalorder %s20, 0
      %p55 = por %p53, %p54
      %p56 = scmp.ne.s32.totalorder %s42, %s43
      %p57 = scmp.eq.s32.totalorder %s21, 1
      %p58 = por %p56, %p57
      %p60 = scmp.ne.s32.totalorder %s43, %s59
      %p61 = scmp.eq.s32.totalorder %s21, 0
      %p62 = por %p60, %p61
      %s63 = ssub.s32 %s22, %s34
      %p64 = scmp.eq.s32.totalorder %s63, 0
      %s66 = sadd.s32 %s65, 1
      %s67 = scalar_select %p64, %s65, %s66
      %p70 = pneg %p64
      %p71 = scmp.eq.s32.totalorder %s15, 1
      %p72 = por %p70, %p71
      %p73 = scmp.ne.s32.totalorder %s65, %s68
      %p74 = scmp.eq.s32.totalorder %s15, 0
      %p75 = por %p73, %p74
      %p76 = scmp.ne.s32.totalorder %s65, %s68
      %p77 = scmp.eq.s32.totalorder %s20, 1
      %p78 = por %p76, %p77
      %p79 = scmp.ne.s32.totalorder %s68, %s69
      %p80 = scmp.eq.s32.totalorder %s20, 0
      %p81 = por %p79, %p80
      %p82 = scmp.ne.s32.totalorder %s68, %s69
      %p83 = scmp.eq.s32.totalorder %s21, 1
      %p84 = por %p82, %p83
      %p86 = scmp.ne.s32.totalorder %s69, %s85
      %p87 = scmp.eq.s32.totalorder %s21, 0
      %p88 = por %p86, %p87
      %s89 = ssub.s32 %s22, %s34
      %p90 = scmp.eq.s32.totalorder %s89, 0
      %s92 = sadd.s32 %s91, 1
      %s93 = scalar_select %p90, %s91, %s92
      %p96 = pneg %p90
      %p97 = scmp.eq.s32.totalorder %s15, 1
      %p98 = por %p96, %p97
      %p99 = scmp.ne.s32.totalorder %s91, %s94
      %p100 = scmp.eq.s32.totalorder %s15, 0
      %p101 = por %p99, %p100
      %p102 = scmp.ne.s32.totalorder %s91, %s94
      %p103 = scmp.eq.s32.totalorder %s20, 1
      %p104 = por %p102, %p103
      %p105 = scmp.ne.s32.totalorder %s94, %s95
      %p106 = scmp.eq.s32.totalorder %s20, 0
      %p107 = por %p105, %p106
      %p108 = scmp.ne.s32.totalorder %s94, %s95
      %p109 = scmp.eq.s32.totalorder %s21, 1
      %p110 = por %p108, %p109
      %p112 = scmp.ne.s32.totalorder %s95, %s111
      %p113 = scmp.eq.s32.totalorder %s21, 0
      %p114 = por %p112, %p113
      %s115 = ssub.s32 %s22, %s34
      %s116 = ssub.s32 %s23, %s30
      %s117 = sor.u32 %s115, %s116
      %p118 = scmp.eq.s32.totalorder %s117, 0
      %s120 = sadd.s32 %s119, 1
      %s121 = scalar_select %p118, %s119, %s120
      %p124 = pneg %p118
      %p125 = scmp.eq.s32.totalorder %s15, 1
      %p126 = por %p124, %p125
      %p127 = scmp.ne.s32.totalorder %s119, %s122
      %p128 = scmp.eq.s32.totalorder %s15, 0
      %p129 = por %p127, %p128
      %p130 = scmp.ne.s32.totalorder %s119, %s122
      %p131 = scmp.eq.s32.totalorder %s20, 1
      %p132 = por %p130, %p131
      %p133 = scmp.ne.s32.totalorder %s122, %s123
      %p134 = scmp.eq.s32.totalorder %s20, 0
      %p135 = por %p133, %p134
      %p136 = scmp.ne.s32.totalorder %s122, %s123
      %p137 = scmp.eq.s32.totalorder %s21, 1
      %p138 = por %p136, %p137
      %p140 = scmp.ne.s32.totalorder %s123, %s139
      %p141 = scmp.eq.s32.totalorder %s21, 0
      %p142 = por %p140, %p141
      %p143 = scmp.le.s32.totalorder 1, %s15
      %p144 = scmp.lt.s32.totalorder %s15, 3
      %p145 = pnand %p143, %p144
      %p146 = pneg %p145
      // Predicated region
      $region9: #{tpu_custom_call.1} parent=5 // pred_check
        _
      $region10: #{tpu_custom_call.1} parent=5 // pred_check_branch
        %148 = sbr.rel (%p145) target = $region12
      $region11: #{tpu_custom_call.1} parent=5 // pred_region
        %s149 = ssub.s32 %s15, 1
      $region12: #{tpu_custom_call.1} parent=5 // pred_fallthru
        _
      %p150 = scmp.lt.s32.totalorder %s15, 2
      // Predicated region
      $region13: #{tpu_custom_call.1} parent=5 // pred_check
        %p151 = pneg %p150
      $region14: #{tpu_custom_call.1} parent=5 // pred_check_branch
        %153 = sbr.rel (%p151) target = $region16
      $region15: #{tpu_custom_call.1} parent=5 // pred_region
        // Predicated region
        $region17: #{tpu_custom_call.1} parent=15 // pred_check
          %p154 = pneg %p49
        $region18: #{tpu_custom_call.1} parent=15 // pred_check_branch
          %156 = sbr.rel (%p154) target = $region20
        $region19: #{tpu_custom_call.1} parent=15 // pred_region
          %s157 = sand.u32 %s39, 1
          %s158 = scalar_lea.sflag [#allocation3], %s157
          %s159 = sand.u32 %s39, 1
          %s160 = smul.addr %s159, 8
          %s161 = scalar_lea.vmem [#allocation2], %s160
          %s162 = smul.u32 2, %s23
          %s164 = ssub.s32 128, 128
          %165 = vsyncadd %s158, %s164
          %s166 = smul.addr %s22, 2
          %s167 = sadd.s32 %s162, %s166
          %s168 = smul.addr %s167, 64
          %s169 = scalar_lea.hbm %s0, %s168
          %s171 = sshll.u32 %s161, 4
          %s172 = int_to_ptr.vmem [resolvable:$true] %s171
          %174 = dma.hbm_to_vmem [thread:$0]  %s169, 128, %s172, %s158
        $region20: #{tpu_custom_call.1} parent=15 // pred_fallthru
          _
        // Predicated region
        $region21: #{tpu_custom_call.1} parent=15 // pred_check
          %p175 = pneg %p75
        $region22: #{tpu_custom_call.1} parent=15 // pred_check_branch
          %177 = sbr.rel (%p175) target = $region24
        $region23: #{tpu_custom_call.1} parent=15 // pred_region
          %p178 = scmp.lt.s32.totalorder %s22, 1
          %s179 = scalar_select %p178, %s22, 1
          %s180 = scalar_lea.vmem %s1, %s179
        $region24: #{tpu_custom_call.1} parent=15 // pred_fallthru
          _
        // Predicated region
        $region25: #{tpu_custom_call.1} parent=15 // pred_check
          %p181 = pneg %p101
        $region26: #{tpu_custom_call.1} parent=15 // pred_check_branch
          %183 = sbr.rel (%p181) target = $region28
        $region27: #{tpu_custom_call.1} parent=15 // pred_region
          %p184 = scmp.lt.s32.totalorder %s22, 1
          %s185 = scalar_select %p184, %s22, 1
          %s186 = smul.addr %s185, 4
          %s187 = scalar_lea.vmem %s2, %s186
        $region28: #{tpu_custom_call.1} parent=15 // pred_fallthru
          _
      $region16: #{tpu_custom_call.1} parent=5 // pred_fallthru
        _
      %p188 = scmp.le.s32.totalorder 1, %s15
      %p189 = scmp.lt.s32.totalorder %s15, 3
      %p190 = pnand %p188, %p189
      %p191 = pneg %p190
      // Predicated region
      $region29: #{tpu_custom_call.1} parent=5 // pred_check
        _
      $region30: #{tpu_custom_call.1} parent=5 // pred_check_branch
        %193 = sbr.rel (%p190) target = $region32
      $region31: #{tpu_custom_call.1} parent=5 // pred_region
        %s194 = ssub.s32 %s15, 1
        %s195 = sand.u32 %s42, 1
        %s196 = scalar_lea.sflag [#allocation3], %s195
        %s197 = sand.u32 %s42, 1
        %s198 = smul.addr %s197, 8
        %s199 = scalar_lea.vmem [#allocation2], %s198
        // Predicated region
        $region33: #{tpu_custom_call.1} parent=31 // pred_check
          %p200 = pneg %p55
        $region34: #{tpu_custom_call.1} parent=31 // pred_check_branch
          %202 = sbr.rel (%p200) target = $region36
        $region35: #{tpu_custom_call.1} parent=31 // pred_region
          %203 = dma.done %s196, 128
        $region36: #{tpu_custom_call.1} parent=31 // pred_fallthru
          _
        %s204 = sand.u32 %s42, 1
        %s205 = scalar_lea.sflag [#allocation3], %s204
        %s206 = sand.u32 %s42, 1
        %s207 = smul.addr %s206, 8
        %s208 = scalar_lea.vmem [#allocation2], %s207
        %p209 = pneg %p55
        %p210 = pneg %p52
        %p211 = scmp.lt.s32.totalorder %s24, 1
        %s212 = scalar_select %p211, %s24, 1
        %s213 = scalar_lea.vmem %s1, %s212
        %p214 = pneg %p81
        %p215 = pneg %p78
        %p216 = scmp.lt.s32.totalorder %s24, 1
        %s217 = scalar_select %p216, %s24, 1
        %s218 = smul.addr %s217, 4
        %s219 = scalar_lea.vmem %s2, %s218
        %p220 = pneg %p107
        %p221 = pneg %p104
        %p222 = pneg %p135
        %p223 = pneg %p132
        %s224 = sand.u32 %s122, 1
        %s225 = scalar_lea.sflag [#allocation4], %s224
        %s226 = sand.u32 %s122, 1
        %s227 = smul.addr %s226, 16
        %s228 = scalar_lea.vmem [#allocation5], %s227
        %s229 = smul.u32 2, %s25
        %p230 = scmp.lt.s32.totalorder %s24, 1
        %s231 = scalar_select %p230, %s24, 1
        %s232 = scalar_lea.vmem %s1, %s231
        %p233 = scmp.lt.s32.totalorder %s24, 1
        %s234 = scalar_select %p233, %s24, 1
        %s235 = smul.addr %s234, 4
        %s236 = scalar_lea.vmem %s2, %s235
        %s237 = smul.u32 2, %s25
        %v238 = vld [vmem:[%s199] sm:$0xff]
        %v239 = vld [vmem:[%s232] sm:$0x1]
        %v240 = vld [vmem:[%s236] sm:$0xf]
        %v242 = vcombine.high %v238, %v238
        %vm243 = vcmask 31744
        %v245 = vsel %vm243, %v239, 0
        %vm247 = vcmask 1043456
        %v248 = vsel %vm247, %v238, 0
        %v250 = vsel %vm247, %v242, 0
        %252 = vmatprep.subr.mxu0 %v250
        %253 = vmatpush1.msra.mxu0 %v248
        %254 = vmatprep.subr.mxu0 0.0
        %255 = vmatpush1.msra.mxu0 0.0
        %256 = vmatprep.subr.mxu0 0.0
        %257 = vmatpush1.msra.mxu0 0.0
        %258 = vmatprep.subr.mxu0 0.0
        %259 = vmatpush1.msra.mxu0 0.0
        %260 = vmatprep.subr.mxu0 0.0
        %261 = vmatpush1.msra.mxu0 0.0
        %262 = vmatprep.subr.mxu0 0.0
        %263 = vmatpush1.msra.mxu0 0.0
        %264 = vmatprep.subr.mxu0 0.0
        %265 = vmatpush1.msra.mxu0 0.0
        %266 = vmatprep.subr.mxu0 0.0
        %267 = vmatpush1.msra.mxu0 0.0
        %268 = vmatprep.subr.mxu0 0.0
        %269 = vmatpush1.msra.mxu0 0.0
        %270 = vmatprep.subr.mxu0 0.0
        %271 = vmatpush1.msra.mxu0 0.0
        %272 = vmatprep.subr.mxu0 0.0
        %273 = vmatpush1.msra.mxu0 0.0
        %274 = vmatprep.subr.mxu0 0.0
        %275 = vmatpush1.msra.mxu0 0.0
        %276 = vmatprep.subr.mxu0 0.0
        %277 = vmatpush1.msra.mxu0 0.0
        %278 = vmatprep.subr.mxu0 0.0
        %279 = vmatpush1.msra.mxu0 0.0
        %280 = vmatprep.subr.mxu0 0.0
        %281 = vmatpush1.msra.mxu0 0.0
        %282 = vmatprep.subr.mxu0 0.0
        %283 = vmatpush1.msra.mxu0 0.0
        %284 = vmatprep.subr.mxu0 0.0
        %285 = vmatpush1.msra.mxu0 0.0
        %286 = vmatprep.subr.mxu0 0.0
        %287 = vmatpush1.msra.mxu0 0.0
        %288 = vmatprep.subr.mxu0 0.0
        %289 = vmatpush1.msra.mxu0 0.0
        %290 = vmatprep.subr.mxu0 0.0
        %291 = vmatpush1.msra.mxu0 0.0
        %292 = vmatprep.subr.mxu0 0.0
        %293 = vmatpush1.msra.mxu0 0.0
        %294 = vmatprep.subr.mxu0 0.0
        %295 = vmatpush1.msra.mxu0 0.0
        %296 = vmatprep.subr.mxu0 0.0
        %297 = vmatpush1.msra.mxu0 0.0
        %298 = vmatprep.subr.mxu0 0.0
        %299 = vmatpush1.msra.mxu0 0.0
        %300 = vmatprep.subr.mxu0 0.0
        %301 = vmatpush1.msra.mxu0 0.0
        %302 = vmatprep.subr.mxu0 0.0
        %303 = vmatpush1.msra.mxu0 0.0
        %304 = vmatprep.subr.mxu0 0.0
        %305 = vmatpush1.msra.mxu0 0.0
        %306 = vmatprep.subr.mxu0 0.0
        %307 = vmatpush1.msra.mxu0 0.0
        %308 = vmatprep.subr.mxu0 0.0
        %309 = vmatpush1.msra.mxu0 0.0
        %310 = vmatprep.subr.mxu0 0.0
        %311 = vmatpush1.msra.mxu0 0.0
        %312 = vmatprep.subr.mxu0 0.0
        %313 = vmatpush1.msra.mxu0 0.0
        %314 = vmatprep.subr.mxu0 0.0
        %315 = vmatpush1.msra.mxu0 0.0
        %316 = vmatprep.mubr.f32.mxu0 0.0
        %317 = vmatmul.mubr.f32.gmra.mrb[0].mxu0 %v245
        %v318 = vpop.f32.mrb[0].mxu0
        %v319 = vadd.f32 0.0, %v318
        %v320 = vpop.f32.mrb[0].mxu0
        %v321 = vadd.f32 0.0, %v320
        %322 = vdwg.mxu0
        %324 = vset.pattern.permute.xlu0 0
        %325 = vperm.xlu0 %324, %v240
        %v326 = vpop.permute.xlu0 %325
        %v328 = vlaneseq
        %v329 = vshrl.u32 %v328, 7
        %v330 = vsub.s32 0, %v329
        %v331 = vrot.slane %v319, %v330
        %v332 = vlaneseq
        %v333 = vshrl.u32 %v332, 7
        %v334 = vsub.s32 0, %v333
        %v335 = vrot.slane %v321, %v334
        %v336 = vmul.f32 %v326, %v331
        %v337 = vmul.f32 %v326, %v335
        %v340 = vcombine.low %v336, %v337
        %v342 = vsub.f32 %v238, %v340
        %s343 = scalar_lea.vmem %s228, 8 [#allocation5]
        %344 = vst [vmem:[%s343] sm:$0xff] %v342
        %v346 = vunpack.c.l.s4 839922192
        %v347 = vunpack.c.0.s8 %v346
        %v348 = vlaneseq
        %v349 = vshrl.u32 %v348, 7
        %v350 = vsub.s32 %v347, %v349
        %v351 = vrot.slane %v326, %v350
        %353 = vst [vmem:[%s228] sm:$0xff] %v351
        %s354 = sand.u32 %s122, 1
        %s355 = scalar_lea.sflag [#allocation4], %s354
        %s356 = sand.u32 %s122, 1
        %s357 = smul.addr %s356, 16
        %s358 = scalar_lea.vmem [#allocation5], %s357
        // Predicated region
        $region37: #{tpu_custom_call.1} parent=31 // pred_check
          %p359 = pneg %p132
        $region38: #{tpu_custom_call.1} parent=31 // pred_check_branch
          %361 = sbr.rel (%p359) target = $region40
        $region39: #{tpu_custom_call.1} parent=31 // pred_region
          %s362 = smul.u32 2, %s25
          %s364 = ssub.s32 256, 256
          %365 = vsyncadd %s355, %s364
          %s366 = smul.addr %s24, 4
          %s367 = sadd.s32 %s362, %s366
          %s368 = smul.addr %s367, 64
          %s369 = scalar_lea.hbm %s3, %s368
          %s370 = sshll.u32 %s358, 4
          %s371 = int_to_ptr.vmem [resolvable:$true] %s370
          %376 = dma.vmem_to_hbm [thread:$0]  %s371, 256, %s369, %s355, 128, 128, 8
        $region40: #{tpu_custom_call.1} parent=31 // pred_fallthru
          _
      $region32: #{tpu_custom_call.1} parent=5 // pred_fallthru
        _
      %p377 = scmp.le.s32.totalorder 2, %s15
      // Predicated region
      $region41: #{tpu_custom_call.1} parent=5 // pred_check
        %p378 = pneg %p377
      $region42: #{tpu_custom_call.1} parent=5 // pred_check_branch
        %380 = sbr.rel (%p378) target = $region44
      $region43: #{tpu_custom_call.1} parent=5 // pred_region
        %s381 = ssub.s32 %s15, 2
        // Predicated region
        $region45: #{tpu_custom_call.1} parent=43 // pred_check
          %p382 = pneg %p138
        $region46: #{tpu_custom_call.1} parent=43 // pred_check_branch
          %384 = sbr.rel (%p382) target = $region48
        $region47: #{tpu_custom_call.1} parent=43 // pred_region
          %s385 = sand.u32 %s123, 1
          %s386 = scalar_lea.sflag [#allocation4], %s385
          %s387 = sand.u32 %s123, 1
          %s388 = smul.addr %s387, 16
          %s389 = scalar_lea.vmem [#allocation5], %s388
          %390 = dma.done %s386, 256
        $region48: #{tpu_custom_call.1} parent=43 // pred_fallthru
          _
      $region44: #{tpu_custom_call.1} parent=5 // pred_fallthru
        _
    $region6: #{tpu_custom_call.1} parent=1 // loop_footer
      %s19 = sadd.s32 1, %s15
    $region7: #{tpu_custom_call.1} parent=1 // loop_footer_branch
      %14 = sbr.rel target = $region3
    $region8: #{tpu_custom_call.1} parent=1 // loop_exit
      _
    %391 = vsyncpa [#allocation3], 1
    %s392 = scalar_lea.sflag [#allocation3], 1
    %393 = vsyncpa %s392, 1
    %394 = vsyncpa [#allocation4], 1
    %s395 = scalar_lea.sflag [#allocation4], 1
    %396 = vsyncpa %s395, 1

</llo_original>
